<compile_context>
chip_gen: v7x
topology: tpu7x:2x2x1
jax: 0.10.0
libtpu: 0.0.40
codegen_flags: <defaults>
</compile_context>

<pallas_src>
import jax
import jax.numpy as jnp
from jax import lax
from jax.experimental import pallas as pl
from jax.experimental.pallas import tpu as pltpu

# Module hyperparameters (from the PyTorch spec)
BATCH_SIZE = 5
HIDDEN_SIZE = 2
INPUT_SIZE = 4
LENGTH = 3

_SUBLANE = 8  # f32 sublane granularity


def _round_up(x, m):
    return ((x + m - 1) // m) * m


def rnn_kernel(x_ref, w_ih_t_ref, w_hh_t_ref, h_all_ref, xproj_ref):
    """Whole-sequence RNN in one invocation.

    x_ref      : (L, Bp, I)   batch-padded inputs, resident in VMEM
    w_ih_t_ref : (I, H)       pre-transposed input weight (unpadded)
    w_hh_t_ref : (H, H)       pre-transposed hidden weight (unpadded)
    h_all_ref  : (L, Bp, H)   per-step hidden states (output)
    xproj_ref  : (L*Bp, H)    VMEM scratch: hoisted input projection
    """
    L, Bp, I = x_ref.shape
    H = h_all_ref.shape[2]

    # Sequence-parallel input projection: a single MXU push over all L*Bp
    # rows (pure sublane-merge reshape, layout no-op), hoisted out of the
    # serialized recurrence.
    x_flat = x_ref[...].reshape(L * Bp, I)
    xproj_ref[...] = jnp.dot(
        x_flat, w_ih_t_ref[...], preferred_element_type=jnp.float32)

    def step(t, h_prev):
        row = pl.multiple_of(t * Bp, _SUBLANE)
        xp_t = xproj_ref[pl.ds(row, Bp), :]                  # (Bp, H)
        h_new = jnp.tanh(
            xp_t + jnp.dot(h_prev, w_hh_t_ref[...],
                           preferred_element_type=jnp.float32))
        h_all_ref[t] = h_new.astype(h_all_ref.dtype)
        return h_new

    lax.fori_loop(0, L, step,
                  jnp.zeros((Bp, H), jnp.float32), unroll=True)


@jax.jit
def rnn_forward(inputs, w_ih, w_hh):
    """inputs: (L, B, I) f32, w_ih: (H, I), w_hh: (H, H)
    -> (h_all (L, B, H), h_last (B, H))."""
    L, B, I = inputs.shape
    H = w_ih.shape[0]

    Bp = _round_up(B, _SUBLANE)

    # Sublane-pad the batch only (zeros); padded batch rows stay exactly zero
    # through the recurrence (zero input rows, zero initial h, tanh(0)=0).
    x_pad = jnp.zeros((L, Bp, I), inputs.dtype).at[:, :B, :].set(inputs)

    h_all_pad = pl.pallas_call(
        rnn_kernel,
        out_shape=jax.ShapeDtypeStruct((L, Bp, H), inputs.dtype),
        in_specs=[
            pl.BlockSpec(memory_space=pltpu.MemorySpace.VMEM),  # x
            pl.BlockSpec(memory_space=pltpu.MemorySpace.VMEM),  # w_ih.T
            pl.BlockSpec(memory_space=pltpu.MemorySpace.VMEM),  # w_hh.T
        ],
        out_specs=pl.BlockSpec(memory_space=pltpu.MemorySpace.VMEM),
        scratch_shapes=[pltpu.VMEM((L * Bp, H), jnp.float32)],
    )(x_pad, w_ih.T, w_hh.T)

    h_all = h_all_pad[:, :B, :]
    return h_all, h_all[-1]


def rnn_reference(inputs, w_ih, w_hh):
    """Pure-JAX reference matching the PyTorch forward exactly."""
    L, B, _ = inputs.shape
    H = w_ih.shape[0]
    h_prev = jnp.zeros((B, H), dtype=inputs.dtype)
    hs = []
    for t in range(L):
        h_prev = jnp.tanh(inputs[t] @ w_ih.T + h_prev @ w_hh.T)
        hs.append(h_prev)
    return jnp.stack(hs, axis=0), hs[-1]


if __name__ == "__main__":
    key = jax.random.PRNGKey(0)
    k_x, k_wih, k_whh = jax.random.split(key, 3)

    # torch.Tensor(...) in the original __init__ is uninitialized memory, so
    # we fill deterministic small random values instead.
    inputs = jax.random.normal(k_x, (LENGTH, BATCH_SIZE, INPUT_SIZE),
                               dtype=jnp.float32)
    w_ih = jax.random.normal(k_wih, (HIDDEN_SIZE, INPUT_SIZE),
                             dtype=jnp.float32) * 0.5
    w_hh = jax.random.normal(k_whh, (HIDDEN_SIZE, HIDDEN_SIZE),
                             dtype=jnp.float32) * 0.5

    h_all, h_last = jax.block_until_ready(rnn_forward(inputs, w_ih, w_hh))

    ref_all, ref_last = rnn_reference(inputs, w_ih, w_hh)
    assert h_all.shape == (LENGTH, BATCH_SIZE, HIDDEN_SIZE)
    assert h_last.shape == (BATCH_SIZE, HIDDEN_SIZE)
    assert jnp.allclose(h_all, ref_all, atol=1e-5, rtol=1e-5)
    assert jnp.allclose(h_last, ref_last, atol=1e-5, rtol=1e-5)

    print("KERNEL_OK")
</pallas_src>

<mosaic_0001>
module attributes {stable_mosaic.version = 11 : i64} {
  func.func @rnn_kernel(%arg0: memref<3x8x4xf32, #tpu.memory_space<vmem>>, %arg1: memref<4x2xf32, #tpu.memory_space<vmem>>, %arg2: memref<2x2xf32, #tpu.memory_space<vmem>>, %arg3: memref<3x8x2xf32, #tpu.memory_space<vmem>>, %arg4: memref<24x2xf32, #tpu.memory_space<vmem>>) attributes {dimension_semantics = [], scalar_prefetch = 0 : i64, scratch_operands = 1 : i64, tpu.core_type = #tpu.core_type<tc>} {
    %c0 = arith.constant 0 : index
    %c0_0 = arith.constant 0 : index
    %c0_1 = arith.constant 0 : index
    %0 = vector.load %arg0[%c0, %c0_0, %c0_1] : memref<3x8x4xf32, #tpu.memory_space<vmem>>, vector<3x8x4xf32>
    %1 = vector.shape_cast %0 : vector<3x8x4xf32> to vector<24x4xf32>
    %c0_2 = arith.constant 0 : index
    %c0_3 = arith.constant 0 : index
    %2 = vector.load %arg1[%c0_2, %c0_3] : memref<4x2xf32, #tpu.memory_space<vmem>>, vector<4x2xf32>
    %cst = arith.constant dense<0.000000e+00> : vector<24x2xf32>
    %3 = tpu.matmul %1, %2, %cst {dimension_numbers = #tpu.dot_dimension_numbers<[1], [0], [0], [1], [0, 0, 1, 1], [], []>} : vector<24x4xf32>, vector<4x2xf32>, vector<24x2xf32> -> vector<24x2xf32>
    %c0_4 = arith.constant 0 : index
    %c0_5 = arith.constant 0 : index
    %4 = vector.load %arg4[%c0_4, %c0_5] : memref<24x2xf32, #tpu.memory_space<vmem>>, vector<24x2xf32>
    tpu.vector_store %arg4[%c0_4, %c0_5], %3 {strides = array<i32>} : memref<24x2xf32, #tpu.memory_space<vmem>>, vector<24x2xf32>,
    %cst_6 = arith.constant 0.000000e+00 : f32
    %5 = vector.broadcast %cst_6 : f32 to vector<8x2xf32>
    %c0_i32 = arith.constant 0 : i32
    %c8_i32 = arith.constant 8 : i32
    %6 = arith.muli %c0_i32, %c8_i32 : i32
    %7 = tpu.assume_multiple %6, 8 : i32
    %8 = arith.index_cast %7 : i32 to index
    %c0_7 = arith.constant 0 : index
    %9 = vector.load %arg4[%8, %c0_7] : memref<24x2xf32, #tpu.memory_space<vmem>>, vector<8x2xf32>
    %c0_8 = arith.constant 0 : index
    %c0_9 = arith.constant 0 : index
    %10 = vector.load %arg2[%c0_8, %c0_9] : memref<2x2xf32, #tpu.memory_space<vmem>>, vector<2x2xf32>
    %cst_10 = arith.constant dense<0.000000e+00> : vector<8x2xf32>
    %11 = tpu.matmul %5, %10, %cst_10 {dimension_numbers = #tpu.dot_dimension_numbers<[1], [0], [0], [1], [0, 0, 1, 1], [], []>} : vector<8x2xf32>, vector<2x2xf32>, vector<8x2xf32> -> vector<8x2xf32>
    %12 = arith.addf %9, %11 : vector<8x2xf32>
    %13 = math.tanh %12 : vector<8x2xf32>
    %14 = arith.index_cast %c0_i32 : i32 to index
    %c0_11 = arith.constant 0 : index
    %c0_12 = arith.constant 0 : index
    %15 = vector.load %arg3[%14, %c0_11, %c0_12] : memref<3x8x2xf32, #tpu.memory_space<vmem>>, vector<1x8x2xf32>
    %16 = vector.shape_cast %15 : vector<1x8x2xf32> to vector<8x2xf32>
    %17 = vector.shape_cast %13 : vector<8x2xf32> to vector<1x8x2xf32>
    tpu.vector_store %arg3[%14, %c0_11, %c0_12], %17 {strides = array<i32>} : memref<3x8x2xf32, #tpu.memory_space<vmem>>, vector<1x8x2xf32>,
    %c1_i32 = arith.constant 1 : i32
    %c8_i32_13 = arith.constant 8 : i32
    %18 = arith.muli %c1_i32, %c8_i32_13 : i32
    %19 = tpu.assume_multiple %18, 8 : i32
    %20 = arith.index_cast %19 : i32 to index
    %c0_14 = arith.constant 0 : index
    %21 = vector.load %arg4[%20, %c0_14] : memref<24x2xf32, #tpu.memory_space<vmem>>, vector<8x2xf32>
    %c0_15 = arith.constant 0 : index
    %c0_16 = arith.constant 0 : index
    %22 = vector.load %arg2[%c0_15, %c0_16] : memref<2x2xf32, #tpu.memory_space<vmem>>, vector<2x2xf32>
    %cst_17 = arith.constant dense<0.000000e+00> : vector<8x2xf32>
    %23 = tpu.matmul %13, %22, %cst_17 {dimension_numbers = #tpu.dot_dimension_numbers<[1], [0], [0], [1], [0, 0, 1, 1], [], []>} : vector<8x2xf32>, vector<2x2xf32>, vector<8x2xf32> -> vector<8x2xf32>
    %24 = arith.addf %21, %23 : vector<8x2xf32>
    %25 = math.tanh %24 : vector<8x2xf32>
    %26 = arith.index_cast %c1_i32 : i32 to index
    %c0_18 = arith.constant 0 : index
    %c0_19 = arith.constant 0 : index
    %27 = vector.load %arg3[%26, %c0_18, %c0_19] : memref<3x8x2xf32, #tpu.memory_space<vmem>>, vector<1x8x2xf32>
    %28 = vector.shape_cast %27 : vector<1x8x2xf32> to vector<8x2xf32>
    %29 = vector.shape_cast %25 : vector<8x2xf32> to vector<1x8x2xf32>
    tpu.vector_store %arg3[%26, %c0_18, %c0_19], %29 {strides = array<i32>} : memref<3x8x2xf32, #tpu.memory_space<vmem>>, vector<1x8x2xf32>,
    %c2_i32 = arith.constant 2 : i32
    %c8_i32_20 = arith.constant 8 : i32
    %30 = arith.muli %c2_i32, %c8_i32_20 : i32
    %31 = tpu.assume_multiple %30, 8 : i32
    %32 = arith.index_cast %31 : i32 to index
    %c0_21 = arith.constant 0 : index
    %33 = vector.load %arg4[%32, %c0_21] : memref<24x2xf32, #tpu.memory_space<vmem>>, vector<8x2xf32>
    %c0_22 = arith.constant 0 : index
    %c0_23 = arith.constant 0 : index
    %34 = vector.load %arg2[%c0_22, %c0_23] : memref<2x2xf32, #tpu.memory_space<vmem>>, vector<2x2xf32>
    %cst_24 = arith.constant dense<0.000000e+00> : vector<8x2xf32>
    %35 = tpu.matmul %25, %34, %cst_24 {dimension_numbers = #tpu.dot_dimension_numbers<[1], [0], [0], [1], [0, 0, 1, 1], [], []>} : vector<8x2xf32>, vector<2x2xf32>, vector<8x2xf32> -> vector<8x2xf32>
    %36 = arith.addf %33, %35 : vector<8x2xf32>
    %37 = math.tanh %36 : vector<8x2xf32>
    %38 = arith.index_cast %c2_i32 : i32 to index
    %c0_25 = arith.constant 0 : index
    %c0_26 = arith.constant 0 : index
    %39 = vector.load %arg3[%38, %c0_25, %c0_26] : memref<3x8x2xf32, #tpu.memory_space<vmem>>, vector<1x8x2xf32>
    %40 = vector.shape_cast %39 : vector<1x8x2xf32> to vector<8x2xf32>
    %41 = vector.shape_cast %37 : vector<8x2xf32> to vector<1x8x2xf32>
    tpu.vector_store %arg3[%38, %c0_25, %c0_26], %41 {strides = array<i32>} : memref<3x8x2xf32, #tpu.memory_space<vmem>>, vector<1x8x2xf32>,
    %c3_i32 = arith.constant 3 : i32
    return
  }
}

</mosaic_0001>

<llo_original>
// kernel: rnn_forward.1
$region0: #{rnn_forward.1}
  #allocation0 [shape = 'u32[]', space=smem, size = 0x4, offset = 0x4, fixed_abs, tag = 'smem constant byte address 0x4 - core index']
  #allocation1 [shape = 'u32[144,128]{1,0:T(1,128)}', space=vmem, size = 0x12000, scoped, tag = 'internal scratch']
  #allocation2 [shape = 'f32[24,2]{1,0:T(8,128)}', space=vmem, size = 0x3000, scoped, tag = 'scratch operand']
  %s0 = inlined_call_operand.vmem [shape: f32[3,8,4], index: 0, kind: input, shape index: {}]
  %s1 = inlined_call_operand.vmem [shape: f32[4,2], index: 1, kind: input, shape index: {}]
  %s2 = inlined_call_operand.vmem [shape: f32[2,2], index: 2, kind: input, shape index: {}]
  %s3 = inlined_call_operand.vmem [shape: f32[3,8,2], index: 3, kind: output, shape index: {}]
  %s4 = sld [smem:[#allocation0]]
  $region22: #{rnn_forward.1} parent=0
    _
  %s6 = ssub.s32 1, %s4
  %s7 = scalar_select 0, %s6, %s4
  // Predicated region
  $region2: #{rnn_forward.1} parent=0 // pred_check
    _
  $region3: #{rnn_forward.1} parent=0 // pred_check_branch
    %9 = sbr.rel (0) target = $region5
  $region4: #{rnn_forward.1} parent=0 // pred_region
    _
  $region5: #{rnn_forward.1} parent=0 // pred_fallthru
    _
  // Predicated region
  $region6: #{rnn_forward.1} parent=0 // pred_check
    _
  $region7: #{rnn_forward.1} parent=0 // pred_check_branch
    %11 = sbr.rel (0) target = $region9
  $region8: #{rnn_forward.1} parent=0 // pred_region
    _
  $region9: #{rnn_forward.1} parent=0 // pred_fallthru
    _
  // Predicated region
  $region10: #{rnn_forward.1} parent=0 // pred_check
    _
  $region11: #{rnn_forward.1} parent=0 // pred_check_branch
    %13 = sbr.rel (0) target = $region13
  $region12: #{rnn_forward.1} parent=0 // pred_region
    _
  $region13: #{rnn_forward.1} parent=0 // pred_fallthru
    _
  %v14 = vld [vmem:[%s0] sm:$0xff]
  %v15 = vld [vmem:[%s0 + $0x8] sm:$0xff]
  %v16 = vld [vmem:[%s0 + $0x10] sm:$0xff]
  %v17 = vld [vmem:[%s1] sm:$0xf]
  %vm18 = vcmask 31744
  %v20 = vsel %vm18, %v14, 0
  %v23 = vsel %vm18, %v15, 0
  %v26 = vsel %vm18, %v16, 0
  %vm28 = vcmask 1043456
  %v30 = vsel %vm28, %v17, 0
  %32 = vmatprep.subr.mxu0 0.0
  %33 = vmatpush1.msra.mxu0 %v30
  %34 = vmatprep.subr.mxu0 0.0
  %35 = vmatpush1.msra.mxu0 0.0
  %36 = vmatprep.subr.mxu0 0.0
  %37 = vmatpush1.msra.mxu0 0.0
  %38 = vmatprep.subr.mxu0 0.0
  %39 = vmatpush1.msra.mxu0 0.0
  %40 = vmatprep.subr.mxu0 0.0
  %41 = vmatpush1.msra.mxu0 0.0
  %42 = vmatprep.subr.mxu0 0.0
  %43 = vmatpush1.msra.mxu0 0.0
  %44 = vmatprep.subr.mxu0 0.0
  %45 = vmatpush1.msra.mxu0 0.0
  %46 = vmatprep.subr.mxu0 0.0
  %47 = vmatpush1.msra.mxu0 0.0
  %48 = vmatprep.subr.mxu0 0.0
  %49 = vmatpush1.msra.mxu0 0.0
  %50 = vmatprep.subr.mxu0 0.0
  %51 = vmatpush1.msra.mxu0 0.0
  %52 = vmatprep.subr.mxu0 0.0
  %53 = vmatpush1.msra.mxu0 0.0
  %54 = vmatprep.subr.mxu0 0.0
  %55 = vmatpush1.msra.mxu0 0.0
  %56 = vmatprep.subr.mxu0 0.0
  %57 = vmatpush1.msra.mxu0 0.0
  %58 = vmatprep.subr.mxu0 0.0
  %59 = vmatpush1.msra.mxu0 0.0
  %60 = vmatprep.subr.mxu0 0.0
  %61 = vmatpush1.msra.mxu0 0.0
  %62 = vmatprep.subr.mxu0 0.0
  %63 = vmatpush1.msra.mxu0 0.0
  %64 = vmatprep.subr.mxu0 0.0
  %65 = vmatpush1.msra.mxu0 0.0
  %66 = vmatprep.subr.mxu0 0.0
  %67 = vmatpush1.msra.mxu0 0.0
  %68 = vmatprep.subr.mxu0 0.0
  %69 = vmatpush1.msra.mxu0 0.0
  %70 = vmatprep.subr.mxu0 0.0
  %71 = vmatpush1.msra.mxu0 0.0
  %72 = vmatprep.subr.mxu0 0.0
  %73 = vmatpush1.msra.mxu0 0.0
  %74 = vmatprep.subr.mxu0 0.0
  %75 = vmatpush1.msra.mxu0 0.0
  %76 = vmatprep.subr.mxu0 0.0
  %77 = vmatpush1.msra.mxu0 0.0
  %78 = vmatprep.subr.mxu0 0.0
  %79 = vmatpush1.msra.mxu0 0.0
  %80 = vmatprep.subr.mxu0 0.0
  %81 = vmatpush1.msra.mxu0 0.0
  %82 = vmatprep.subr.mxu0 0.0
  %83 = vmatpush1.msra.mxu0 0.0
  %84 = vmatprep.subr.mxu0 0.0
  %85 = vmatpush1.msra.mxu0 0.0
  %86 = vmatprep.subr.mxu0 0.0
  %87 = vmatpush1.msra.mxu0 0.0
  %88 = vmatprep.subr.mxu0 0.0
  %89 = vmatpush1.msra.mxu0 0.0
  %90 = vmatprep.subr.mxu0 0.0
  %91 = vmatpush1.msra.mxu0 0.0
  %92 = vmatprep.subr.mxu0 0.0
  %93 = vmatpush1.msra.mxu0 0.0
  %94 = vmatprep.subr.mxu0 0.0
  %95 = vmatpush1.msra.mxu0 0.0
  %96 = vmatprep.mubr.f32.mxu0 0.0
  %97 = vmatmul.mubr.f32.gmra.mrb[0].mxu0 %v20
  %v98 = vpop.f32.mrb[0].mxu0
  %v99 = vadd.f32 0.0, %v98
  %v100 = vpop.f32.mrb[0].mxu0
  %101 = vmatprep.mubr.f32.mxu0 0.0
  %102 = vmatmul.mubr.f32.gmra.mrb[0].mxu0 %v23
  %v103 = vpop.f32.mrb[0].mxu0
  %v104 = vadd.f32 0.0, %v103
  %v105 = vpop.f32.mrb[0].mxu0
  %106 = vmatprep.mubr.f32.mxu0 0.0
  %107 = vmatmul.mubr.f32.gmra.mrb[0].mxu0 %v26
  %v108 = vpop.f32.mrb[0].mxu0
  %v109 = vadd.f32 0.0, %v108
  %v110 = vpop.f32.mrb[0].mxu0
  %111 = vdwg.mxu0
  %vm112 = vcmask 15360
  %113 = vst.msk [vmem:[#allocation2] sm:$0xff] %vm112, %v99
  %114 = vst.msk [vmem:[#allocation2 + $0x8] sm:$0xff] %vm112, %v104
  %115 = vst.msk [vmem:[#allocation2 + $0x10] sm:$0xff] %vm112, %v109
  %v116 = vld [vmem:[#allocation2] sm:$0xff]
  %v117 = vld [vmem:[%s2] sm:$0x3]
  %v119 = vsel %vm112, 0.0, 0
  %vm121 = vcmask 1041408
  %v123 = vsel %vm121, %v117, 0
  %125 = vmatprep.subr.mxu0 0.0
  %126 = vmatpush1.msra.mxu0 %v123
  %127 = vmatprep.subr.mxu0 0.0
  %128 = vmatpush1.msra.mxu0 0.0
  %129 = vmatprep.subr.mxu0 0.0
  %130 = vmatpush1.msra.mxu0 0.0
  %131 = vmatprep.subr.mxu0 0.0
  %132 = vmatpush1.msra.mxu0 0.0
  %133 = vmatprep.subr.mxu0 0.0
  %134 = vmatpush1.msra.mxu0 0.0
  %135 = vmatprep.subr.mxu0 0.0
  %136 = vmatpush1.msra.mxu0 0.0
  %137 = vmatprep.subr.mxu0 0.0
  %138 = vmatpush1.msra.mxu0 0.0
  %139 = vmatprep.subr.mxu0 0.0
  %140 = vmatpush1.msra.mxu0 0.0
  %141 = vmatprep.subr.mxu0 0.0
  %142 = vmatpush1.msra.mxu0 0.0
  %143 = vmatprep.subr.mxu0 0.0
  %144 = vmatpush1.msra.mxu0 0.0
  %145 = vmatprep.subr.mxu0 0.0
  %146 = vmatpush1.msra.mxu0 0.0
  %147 = vmatprep.subr.mxu0 0.0
  %148 = vmatpush1.msra.mxu0 0.0
  %149 = vmatprep.subr.mxu0 0.0
  %150 = vmatpush1.msra.mxu0 0.0
  %151 = vmatprep.subr.mxu0 0.0
  %152 = vmatpush1.msra.mxu0 0.0
  %153 = vmatprep.subr.mxu0 0.0
  %154 = vmatpush1.msra.mxu0 0.0
  %155 = vmatprep.subr.mxu0 0.0
  %156 = vmatpush1.msra.mxu0 0.0
  %157 = vmatprep.subr.mxu0 0.0
  %158 = vmatpush1.msra.mxu0 0.0
  %159 = vmatprep.subr.mxu0 0.0
  %160 = vmatpush1.msra.mxu0 0.0
  %161 = vmatprep.subr.mxu0 0.0
  %162 = vmatpush1.msra.mxu0 0.0
  %163 = vmatprep.subr.mxu0 0.0
  %164 = vmatpush1.msra.mxu0 0.0
  %165 = vmatprep.subr.mxu0 0.0
  %166 = vmatpush1.msra.mxu0 0.0
  %167 = vmatprep.subr.mxu0 0.0
  %168 = vmatpush1.msra.mxu0 0.0
  %169 = vmatprep.subr.mxu0 0.0
  %170 = vmatpush1.msra.mxu0 0.0
  %171 = vmatprep.subr.mxu0 0.0
  %172 = vmatpush1.msra.mxu0 0.0
  %173 = vmatprep.subr.mxu0 0.0
  %174 = vmatpush1.msra.mxu0 0.0
  %175 = vmatprep.subr.mxu0 0.0
  %176 = vmatpush1.msra.mxu0 0.0
  %177 = vmatprep.subr.mxu0 0.0
  %178 = vmatpush1.msra.mxu0 0.0
  %179 = vmatprep.subr.mxu0 0.0
  %180 = vmatpush1.msra.mxu0 0.0
  %181 = vmatprep.subr.mxu0 0.0
  %182 = vmatpush1.msra.mxu0 0.0
  %183 = vmatprep.subr.mxu0 0.0
  %184 = vmatpush1.msra.mxu0 0.0
  %185 = vmatprep.subr.mxu0 0.0
  %186 = vmatpush1.msra.mxu0 0.0
  %187 = vmatprep.subr.mxu0 0.0
  %188 = vmatpush1.msra.mxu0 0.0
  %189 = vmatprep.mubr.f32.mxu0 0.0
  %190 = vmatmul.mubr.f32.gmra.mrb[0].mxu0 %v119
  %v191 = vpop.f32.mrb[0].mxu0
  %v192 = vadd.f32 0.0, %v191
  %v193 = vpop.f32.mrb[0].mxu0
  %194 = vdwg.mxu0
  %v195 = vadd.f32 %v116, %v192
  %v196 = vtanh.pop %v195
  %197 = vst.msk [vmem:[%s3] sm:$0xff] %vm112, %v196
  %s198 = scalar_lea.vmem [#allocation2], 8
  %v199 = vld [vmem:[%s198] sm:$0xff]
  %v200 = vld [vmem:[%s2] sm:$0x3]
  %v202 = vsel %vm112, %v196, 0
  %v205 = vsel %vm121, %v200, 0
  %207 = vmatprep.subr.mxu0 0.0
  %208 = vmatpush1.msra.mxu0 %v205
  %209 = vmatprep.subr.mxu0 0.0
  %210 = vmatpush1.msra.mxu0 0.0
  %211 = vmatprep.subr.mxu0 0.0
  %212 = vmatpush1.msra.mxu0 0.0
  %213 = vmatprep.subr.mxu0 0.0
  %214 = vmatpush1.msra.mxu0 0.0
  %215 = vmatprep.subr.mxu0 0.0
  %216 = vmatpush1.msra.mxu0 0.0
  %217 = vmatprep.subr.mxu0 0.0
  %218 = vmatpush1.msra.mxu0 0.0
  %219 = vmatprep.subr.mxu0 0.0
  %220 = vmatpush1.msra.mxu0 0.0
  %221 = vmatprep.subr.mxu0 0.0
  %222 = vmatpush1.msra.mxu0 0.0
  %223 = vmatprep.subr.mxu0 0.0
  %224 = vmatpush1.msra.mxu0 0.0
  %225 = vmatprep.subr.mxu0 0.0
  %226 = vmatpush1.msra.mxu0 0.0
  %227 = vmatprep.subr.mxu0 0.0
  %228 = vmatpush1.msra.mxu0 0.0
  %229 = vmatprep.subr.mxu0 0.0
  %230 = vmatpush1.msra.mxu0 0.0
  %231 = vmatprep.subr.mxu0 0.0
  %232 = vmatpush1.msra.mxu0 0.0
  %233 = vmatprep.subr.mxu0 0.0
  %234 = vmatpush1.msra.mxu0 0.0
  %235 = vmatprep.subr.mxu0 0.0
  %236 = vmatpush1.msra.mxu0 0.0
  %237 = vmatprep.subr.mxu0 0.0
  %238 = vmatpush1.msra.mxu0 0.0
  %239 = vmatprep.subr.mxu0 0.0
  %240 = vmatpush1.msra.mxu0 0.0
  %241 = vmatprep.subr.mxu0 0.0
  %242 = vmatpush1.msra.mxu0 0.0
  %243 = vmatprep.subr.mxu0 0.0
  %244 = vmatpush1.msra.mxu0 0.0
  %245 = vmatprep.subr.mxu0 0.0
  %246 = vmatpush1.msra.mxu0 0.0
  %247 = vmatprep.subr.mxu0 0.0
  %248 = vmatpush1.msra.mxu0 0.0
  %249 = vmatprep.subr.mxu0 0.0
  %250 = vmatpush1.msra.mxu0 0.0
  %251 = vmatprep.subr.mxu0 0.0
  %252 = vmatpush1.msra.mxu0 0.0
  %253 = vmatprep.subr.mxu0 0.0
  %254 = vmatpush1.msra.mxu0 0.0
  %255 = vmatprep.subr.mxu0 0.0
  %256 = vmatpush1.msra.mxu0 0.0
  %257 = vmatprep.subr.mxu0 0.0
  %258 = vmatpush1.msra.mxu0 0.0
  %259 = vmatprep.subr.mxu0 0.0
  %260 = vmatpush1.msra.mxu0 0.0
  %261 = vmatprep.subr.mxu0 0.0
  %262 = vmatpush1.msra.mxu0 0.0
  %263 = vmatprep.subr.mxu0 0.0
  %264 = vmatpush1.msra.mxu0 0.0
  %265 = vmatprep.subr.mxu0 0.0
  %266 = vmatpush1.msra.mxu0 0.0
  %267 = vmatprep.subr.mxu0 0.0
  %268 = vmatpush1.msra.mxu0 0.0
  %269 = vmatprep.subr.mxu0 0.0
  %270 = vmatpush1.msra.mxu0 0.0
  %271 = vmatprep.mubr.f32.mxu0 0.0
  %272 = vmatmul.mubr.f32.gmra.mrb[0].mxu0 %v202
  %v273 = vpop.f32.mrb[0].mxu0
  %v274 = vadd.f32 0.0, %v273
  %v275 = vpop.f32.mrb[0].mxu0
  %276 = vdwg.mxu0
  %v277 = vadd.f32 %v199, %v274
  %v278 = vtanh.pop %v277
  %s279 = scalar_lea.vmem %s3, 8
  %280 = vst.msk [vmem:[%s279] sm:$0xff] %vm112, %v278
  %s281 = scalar_lea.vmem [#allocation2], 16
  %v282 = vld [vmem:[%s281] sm:$0xff]
  %v283 = vld [vmem:[%s2] sm:$0x3]
  %v285 = vsel %vm112, %v278, 0
  %v288 = vsel %vm121, %v283, 0
  %290 = vmatprep.subr.mxu0 0.0
  %291 = vmatpush1.msra.mxu0 %v288
  %292 = vmatprep.subr.mxu0 0.0
  %293 = vmatpush1.msra.mxu0 0.0
  %294 = vmatprep.subr.mxu0 0.0
  %295 = vmatpush1.msra.mxu0 0.0
  %296 = vmatprep.subr.mxu0 0.0
  %297 = vmatpush1.msra.mxu0 0.0
  %298 = vmatprep.subr.mxu0 0.0
  %299 = vmatpush1.msra.mxu0 0.0
  %300 = vmatprep.subr.mxu0 0.0
  %301 = vmatpush1.msra.mxu0 0.0
  %302 = vmatprep.subr.mxu0 0.0
  %303 = vmatpush1.msra.mxu0 0.0
  %304 = vmatprep.subr.mxu0 0.0
  %305 = vmatpush1.msra.mxu0 0.0
  %306 = vmatprep.subr.mxu0 0.0
  %307 = vmatpush1.msra.mxu0 0.0
  %308 = vmatprep.subr.mxu0 0.0
  %309 = vmatpush1.msra.mxu0 0.0
  %310 = vmatprep.subr.mxu0 0.0
  %311 = vmatpush1.msra.mxu0 0.0
  %312 = vmatprep.subr.mxu0 0.0
  %313 = vmatpush1.msra.mxu0 0.0
  %314 = vmatprep.subr.mxu0 0.0
  %315 = vmatpush1.msra.mxu0 0.0
  %316 = vmatprep.subr.mxu0 0.0
  %317 = vmatpush1.msra.mxu0 0.0
  %318 = vmatprep.subr.mxu0 0.0
  %319 = vmatpush1.msra.mxu0 0.0
  %320 = vmatprep.subr.mxu0 0.0
  %321 = vmatpush1.msra.mxu0 0.0
  %322 = vmatprep.subr.mxu0 0.0
  %323 = vmatpush1.msra.mxu0 0.0
  %324 = vmatprep.subr.mxu0 0.0
  %325 = vmatpush1.msra.mxu0 0.0
  %326 = vmatprep.subr.mxu0 0.0
  %327 = vmatpush1.msra.mxu0 0.0
  %328 = vmatprep.subr.mxu0 0.0
  %329 = vmatpush1.msra.mxu0 0.0
  %330 = vmatprep.subr.mxu0 0.0
  %331 = vmatpush1.msra.mxu0 0.0
  %332 = vmatprep.subr.mxu0 0.0
  %333 = vmatpush1.msra.mxu0 0.0
  %334 = vmatprep.subr.mxu0 0.0
  %335 = vmatpush1.msra.mxu0 0.0
  %336 = vmatprep.subr.mxu0 0.0
  %337 = vmatpush1.msra.mxu0 0.0
  %338 = vmatprep.subr.mxu0 0.0
  %339 = vmatpush1.msra.mxu0 0.0
  %340 = vmatprep.subr.mxu0 0.0
  %341 = vmatpush1.msra.mxu0 0.0
  %342 = vmatprep.subr.mxu0 0.0
  %343 = vmatpush1.msra.mxu0 0.0
  %344 = vmatprep.subr.mxu0 0.0
  %345 = vmatpush1.msra.mxu0 0.0
  %346 = vmatprep.subr.mxu0 0.0
  %347 = vmatpush1.msra.mxu0 0.0
  %348 = vmatprep.subr.mxu0 0.0
  %349 = vmatpush1.msra.mxu0 0.0
  %350 = vmatprep.subr.mxu0 0.0
  %351 = vmatpush1.msra.mxu0 0.0
  %352 = vmatprep.subr.mxu0 0.0
  %353 = vmatpush1.msra.mxu0 0.0
  %354 = vmatprep.mubr.f32.mxu0 0.0
  %355 = vmatmul.mubr.f32.gmra.mrb[0].mxu0 %v285
  %v356 = vpop.f32.mrb[0].mxu0
  %v357 = vadd.f32 0.0, %v356
  %v358 = vpop.f32.mrb[0].mxu0
  %359 = vdwg.mxu0
  %v360 = vadd.f32 %v282, %v357
  %v361 = vtanh.pop %v360
  %s362 = scalar_lea.vmem %s3, 16
  %363 = vst.msk [vmem:[%s362] sm:$0xff] %vm112, %v361
  // Predicated region
  $region14: #{rnn_forward.1} parent=0 // pred_check
    _
  $region15: #{rnn_forward.1} parent=0 // pred_check_branch
    %365 = sbr.rel (0) target = $region17
  $region16: #{rnn_forward.1} parent=0 // pred_region
    _
  $region17: #{rnn_forward.1} parent=0 // pred_fallthru
    _
  // Predicated region
  $region18: #{rnn_forward.1} parent=0 // pred_check
    _
  $region19: #{rnn_forward.1} parent=0 // pred_check_branch
    %367 = sbr.rel (0) target = $region21
  $region20: #{rnn_forward.1} parent=0 // pred_region
    _
  $region21: #{rnn_forward.1} parent=0 // pred_fallthru
    _

</llo_original>
